<compile_context>
chip_gen: v7x
topology: tpu7x:2x2x1
jax: 0.10.0
libtpu: 0.0.40
codegen_flags: <defaults>
</compile_context>

<pallas_src>
import jax
import jax.numpy as jnp
from jax.experimental import pallas as pl
from jax.experimental.pallas import tpu as pltpu

_MiB = 1024 * 1024


def _tpu_vmem_capacity_bytes():
    try:
        return int(pltpu.get_tpu_info().vmem_capacity_bytes)
    except Exception:
        return 64 * _MiB  # conservative fallback (v7x-sized VMEM)


_VMEM_CAP = _tpu_vmem_capacity_bytes()

# Generation-aware fused-path budget (total in+out bytes of all four tensors):
#   * v5e / v6e (128 MiB physical VMEM, single TC): go big — a single fused
#     call beats four tiled calls up to ~80 MiB of traffic.
#   * v7x (64 MiB physical, 2 TCs): keep the fused path for the small regime
#     only; mid-size work goes to the tiled "parallel" path so both
#     TensorCores stream HBM.
if _VMEM_CAP >= 96 * _MiB:
    _FUSED_VMEM_BUDGET_BYTES = 80 * _MiB
    _FUSED_VMEM_LIMIT_BYTES = 100 * _MiB
else:
    _FUSED_VMEM_BUDGET_BYTES = 24 * _MiB
    _FUSED_VMEM_LIMIT_BYTES = 40 * _MiB

# Tiled path: ~4 MiB blocks (in+out double-buffered ~= 16 MiB VMEM) amortize
# the ~0.35 us per-grid-step overhead even at v7x's ~3.2 TB/s HBM.
_TILED_BLOCK_BYTES = 4 * _MiB
_TILED_VMEM_LIMIT_BYTES = int(min(64 * _MiB, (_VMEM_CAP * 3) // 4))


def _hs_2xm1(t_f32):
    # hardsigmoid(2t - 1) computed literally: relu6((2t - 1) + 3) * (1/6).
    s = t_f32 * 2.0 - 1.0
    return jnp.clip(s + 3.0, 0.0, 6.0) * (1.0 / 6.0)


def _fused_kernel(x_ref, y_ref, z_ref, w_ref, ox_ref, oy_ref, oz_ref, ow_ref):
    # Purely elementwise; upcast to f32 in-register, store back in out dtype.
    for i_ref, o_ref in ((x_ref, ox_ref), (y_ref, oy_ref),
                         (z_ref, oz_ref), (w_ref, ow_ref)):
        t = i_ref[...].astype(jnp.float32)
        o_ref[...] = _hs_2xm1(t).astype(o_ref.dtype)


def _tiled_kernel(x_ref, o_ref):
    o_ref[...] = _hs_2xm1(x_ref[...].astype(jnp.float32)).astype(o_ref.dtype)


def _lane_dense_view(a):
    """Free (layout-preserving) 2-D view that is as lane-dense as possible."""
    n = int(a.size)
    # Prefer a wide, 128-aligned column count -> unmasked vst on the output.
    for c in (4096, 2048, 1024, 512, 256, 128):
        if n % c == 0:
            return a.reshape(n // c, c)
    # n not a multiple of 128: collapse trailing dims into the widest column
    # (<= 4096) so the masked store tail is a tiny fraction of each row.
    if a.ndim >= 2:
        best = int(a.shape[-1])
        suffix = 1
        for d in reversed(a.shape):
            suffix *= int(d)
            if suffix > 4096:
                break
            best = suffix
        return a.reshape(n // best, best)
    return a.reshape(1, n)


def _fused_forward(arrs):
    """Single pallas_call over all four tensors (whole arrays resident in VMEM)."""
    views = [_lane_dense_view(a) for a in arrs]
    total_elems = sum(int(v.size) for v in views)
    total_bytes = sum(int(v.size) * v.dtype.itemsize for v in views)
    outs = pl.pallas_call(
        _fused_kernel,
        out_shape=tuple(jax.ShapeDtypeStruct(v.shape, v.dtype) for v in views),
        cost_estimate=pl.CostEstimate(
            flops=5 * total_elems,
            transcendentals=0,
            bytes_accessed=2 * total_bytes,
        ),
        compiler_params=pltpu.CompilerParams(
            vmem_limit_bytes=_FUSED_VMEM_LIMIT_BYTES,
        ),
    )(*views)
    return tuple(o.reshape(a.shape) for o, a in zip(outs, arrs))


def _tiled_hardsigmoid(a, block_bytes=_TILED_BLOCK_BYTES):
    """Per-tensor tiled path for large inputs (no pad, parallel row grid)."""
    shape, dtype = a.shape, a.dtype
    a2 = _lane_dense_view(a)
    R, C = a2.shape
    itemsize = int(jnp.dtype(dtype).itemsize)

    # Block sized from the actual dtype; rows a multiple of 8 (sublane tiling).
    target_rows = max(8, block_bytes // max(1, itemsize * C))
    block_rows = max(8, (target_rows // 8) * 8)
    if block_rows >= R:
        block_rows = R  # single block over rows (full-extent exception)

    n = int(a2.size)
    grid = (pl.cdiv(R, block_rows),)
    out = pl.pallas_call(
        _tiled_kernel,
        out_shape=jax.ShapeDtypeStruct((R, C), dtype),
        grid_spec=pl.GridSpec(
            grid=grid,
            in_specs=[pl.BlockSpec((block_rows, C), lambda i: (i, 0))],
            out_specs=pl.BlockSpec((block_rows, C), lambda i: (i, 0)),
        ),
        cost_estimate=pl.CostEstimate(
            flops=5 * n,
            transcendentals=0,
            bytes_accessed=2 * n * itemsize,
        ),
        compiler_params=pltpu.CompilerParams(
            dimension_semantics=("parallel",),  # shards rows across TCs on v7x
            vmem_limit_bytes=_TILED_VMEM_LIMIT_BYTES,
        ),
    )(a2)
    return out.reshape(shape)


def model_forward(x, y, z, w):
    """Pallas equivalent of Model.forward: hardsigmoid(t*2 - 1) for each input."""
    arrs = (x, y, z, w)
    fused_bytes = sum(2 * int(a.size) * jnp.dtype(a.dtype).itemsize for a in arrs)
    if fused_bytes <= _FUSED_VMEM_BUDGET_BYTES:
        return _fused_forward(arrs)
    return tuple(_tiled_hardsigmoid(a) for a in arrs)


def _ref_forward(x, y, z, w):
    def hs(t):
        t = t * 2.0 - 1.0
        return jnp.clip(t + 3.0, 0.0, 6.0) / 6.0
    return hs(x), hs(y), hs(z), hs(w)


if __name__ == "__main__":
    key = jax.random.PRNGKey(0)
    kx, ky, kz, kw = jax.random.split(key, 4)

    # Small shapes consistent with the pnnx test (2-D, 3-D, 4-D, 4-D inputs).
    x = jax.random.normal(kx, (1, 16), dtype=jnp.float32)
    y = jax.random.normal(ky, (2, 8, 16), dtype=jnp.float32)
    z = jax.random.normal(kz, (2, 4, 8, 16), dtype=jnp.float32)
    w = jax.random.normal(kw, (2, 4, 8, 16), dtype=jnp.float32)

    outs = model_forward(x, y, z, w)
    outs = jax.block_until_ready(outs)

    refs = _ref_forward(x, y, z, w)
    for o, r in zip(outs, refs):
        assert o.shape == r.shape and o.dtype == r.dtype
        tol = 1e-6 if o.dtype == jnp.float32 else 2e-3  # dtype-scaled tolerance
        assert float(jnp.max(jnp.abs(o.astype(jnp.float32) -
                                     r.astype(jnp.float32)))) < tol

    print("KERNEL_OK")
</pallas_src>

<mosaic_0001>
module attributes {stable_mosaic.version = 11 : i64} {
  func.func @_fused_kernel(%arg0: memref<1x16xf32, #tpu.memory_space<vmem>>, %arg1: memref<1x256xf32, #tpu.memory_space<vmem>>, %arg2: memref<1x1024xf32, #tpu.memory_space<vmem>>, %arg3: memref<1x1024xf32, #tpu.memory_space<vmem>>, %arg4: memref<1x16xf32, #tpu.memory_space<vmem>>, %arg5: memref<1x256xf32, #tpu.memory_space<vmem>>, %arg6: memref<1x1024xf32, #tpu.memory_space<vmem>>, %arg7: memref<1x1024xf32, #tpu.memory_space<vmem>>) attributes {dimension_semantics = [], scalar_prefetch = 0 : i64, scratch_operands = 0 : i64, tpu.core_type = #tpu.core_type<tc>} {
    %c0 = arith.constant 0 : index
    %c0_0 = arith.constant 0 : index
    %0 = vector.load %arg0[%c0, %c0_0] : memref<1x16xf32, #tpu.memory_space<vmem>>, vector<1x16xf32>
    %cst = arith.constant 2.000000e+00 : f32
    %1 = vector.broadcast %cst : f32 to vector<1x16xf32>
    %2 = arith.mulf %0, %1 : vector<1x16xf32>
    %cst_1 = arith.constant 1.000000e+00 : f32
    %3 = vector.broadcast %cst_1 : f32 to vector<1x16xf32>
    %4 = arith.subf %2, %3 : vector<1x16xf32>
    %cst_2 = arith.constant 3.000000e+00 : f32
    %5 = vector.broadcast %cst_2 : f32 to vector<1x16xf32>
    %6 = arith.addf %4, %5 : vector<1x16xf32>
    %cst_3 = arith.constant 0.000000e+00 : f32
    %cst_4 = arith.constant 6.000000e+00 : f32
    %7 = vector.broadcast %cst_3 : f32 to vector<1x16xf32>
    %8 = arith.maximumf %7, %6 : vector<1x16xf32>
    %9 = vector.broadcast %cst_4 : f32 to vector<1x16xf32>
    %10 = arith.minimumf %9, %8 : vector<1x16xf32>
    %cst_5 = arith.constant 0.166666672 : f32
    %11 = vector.broadcast %cst_5 : f32 to vector<1x16xf32>
    %12 = arith.mulf %10, %11 : vector<1x16xf32>
    %c0_6 = arith.constant 0 : index
    %c0_7 = arith.constant 0 : index
    %13 = vector.load %arg4[%c0_6, %c0_7] : memref<1x16xf32, #tpu.memory_space<vmem>>, vector<1x16xf32>
    tpu.vector_store %arg4[%c0_6, %c0_7], %12 {strides = array<i32>} : memref<1x16xf32, #tpu.memory_space<vmem>>, vector<1x16xf32>,
    %c0_8 = arith.constant 0 : index
    %c0_9 = arith.constant 0 : index
    %14 = vector.load %arg1[%c0_8, %c0_9] : memref<1x256xf32, #tpu.memory_space<vmem>>, vector<1x256xf32>
    %cst_10 = arith.constant 2.000000e+00 : f32
    %15 = vector.broadcast %cst_10 : f32 to vector<1x256xf32>
    %16 = arith.mulf %14, %15 : vector<1x256xf32>
    %cst_11 = arith.constant 1.000000e+00 : f32
    %17 = vector.broadcast %cst_11 : f32 to vector<1x256xf32>
    %18 = arith.subf %16, %17 : vector<1x256xf32>
    %cst_12 = arith.constant 3.000000e+00 : f32
    %19 = vector.broadcast %cst_12 : f32 to vector<1x256xf32>
    %20 = arith.addf %18, %19 : vector<1x256xf32>
    %cst_13 = arith.constant 0.000000e+00 : f32
    %cst_14 = arith.constant 6.000000e+00 : f32
    %21 = vector.broadcast %cst_13 : f32 to vector<1x256xf32>
    %22 = arith.maximumf %21, %20 : vector<1x256xf32>
    %23 = vector.broadcast %cst_14 : f32 to vector<1x256xf32>
    %24 = arith.minimumf %23, %22 : vector<1x256xf32>
    %cst_15 = arith.constant 0.166666672 : f32
    %25 = vector.broadcast %cst_15 : f32 to vector<1x256xf32>
    %26 = arith.mulf %24, %25 : vector<1x256xf32>
    %c0_16 = arith.constant 0 : index
    %c0_17 = arith.constant 0 : index
    %27 = vector.load %arg5[%c0_16, %c0_17] : memref<1x256xf32, #tpu.memory_space<vmem>>, vector<1x256xf32>
    tpu.vector_store %arg5[%c0_16, %c0_17], %26 {strides = array<i32>} : memref<1x256xf32, #tpu.memory_space<vmem>>, vector<1x256xf32>,
    %c0_18 = arith.constant 0 : index
    %c0_19 = arith.constant 0 : index
    %28 = vector.load %arg2[%c0_18, %c0_19] : memref<1x1024xf32, #tpu.memory_space<vmem>>, vector<1x1024xf32>
    %cst_20 = arith.constant 2.000000e+00 : f32
    %29 = vector.broadcast %cst_20 : f32 to vector<1x1024xf32>
    %30 = arith.mulf %28, %29 : vector<1x1024xf32>
    %cst_21 = arith.constant 1.000000e+00 : f32
    %31 = vector.broadcast %cst_21 : f32 to vector<1x1024xf32>
    %32 = arith.subf %30, %31 : vector<1x1024xf32>
    %cst_22 = arith.constant 3.000000e+00 : f32
    %33 = vector.broadcast %cst_22 : f32 to vector<1x1024xf32>
    %34 = arith.addf %32, %33 : vector<1x1024xf32>
    %cst_23 = arith.constant 0.000000e+00 : f32
    %cst_24 = arith.constant 6.000000e+00 : f32
    %35 = vector.broadcast %cst_23 : f32 to vector<1x1024xf32>
    %36 = arith.maximumf %35, %34 : vector<1x1024xf32>
    %37 = vector.broadcast %cst_24 : f32 to vector<1x1024xf32>
    %38 = arith.minimumf %37, %36 : vector<1x1024xf32>
    %cst_25 = arith.constant 0.166666672 : f32
    %39 = vector.broadcast %cst_25 : f32 to vector<1x1024xf32>
    %40 = arith.mulf %38, %39 : vector<1x1024xf32>
    %c0_26 = arith.constant 0 : index
    %c0_27 = arith.constant 0 : index
    %41 = vector.load %arg6[%c0_26, %c0_27] : memref<1x1024xf32, #tpu.memory_space<vmem>>, vector<1x1024xf32>
    tpu.vector_store %arg6[%c0_26, %c0_27], %40 {strides = array<i32>} : memref<1x1024xf32, #tpu.memory_space<vmem>>, vector<1x1024xf32>,
    %c0_28 = arith.constant 0 : index
    %c0_29 = arith.constant 0 : index
    %42 = vector.load %arg3[%c0_28, %c0_29] : memref<1x1024xf32, #tpu.memory_space<vmem>>, vector<1x1024xf32>
    %cst_30 = arith.constant 2.000000e+00 : f32
    %43 = vector.broadcast %cst_30 : f32 to vector<1x1024xf32>
    %44 = arith.mulf %42, %43 : vector<1x1024xf32>
    %cst_31 = arith.constant 1.000000e+00 : f32
    %45 = vector.broadcast %cst_31 : f32 to vector<1x1024xf32>
    %46 = arith.subf %44, %45 : vector<1x1024xf32>
    %cst_32 = arith.constant 3.000000e+00 : f32
    %47 = vector.broadcast %cst_32 : f32 to vector<1x1024xf32>
    %48 = arith.addf %46, %47 : vector<1x1024xf32>
    %cst_33 = arith.constant 0.000000e+00 : f32
    %cst_34 = arith.constant 6.000000e+00 : f32
    %49 = vector.broadcast %cst_33 : f32 to vector<1x1024xf32>
    %50 = arith.maximumf %49, %48 : vector<1x1024xf32>
    %51 = vector.broadcast %cst_34 : f32 to vector<1x1024xf32>
    %52 = arith.minimumf %51, %50 : vector<1x1024xf32>
    %cst_35 = arith.constant 0.166666672 : f32
    %53 = vector.broadcast %cst_35 : f32 to vector<1x1024xf32>
    %54 = arith.mulf %52, %53 : vector<1x1024xf32>
    %c0_36 = arith.constant 0 : index
    %c0_37 = arith.constant 0 : index
    %55 = vector.load %arg7[%c0_36, %c0_37] : memref<1x1024xf32, #tpu.memory_space<vmem>>, vector<1x1024xf32>
    tpu.vector_store %arg7[%c0_36, %c0_37], %54 {strides = array<i32>} : memref<1x1024xf32, #tpu.memory_space<vmem>>, vector<1x1024xf32>,
    return
  }
}

</mosaic_0001>

<llo_original>
// kernel: tpu_custom_call.1
$region0: #{tpu_custom_call.1}
  #allocation0 [shape = 'u32[]', space=smem, size = 0x4, offset = 0x4, fixed_abs, tag = 'smem constant byte address 0x4 - core index']
  #allocation1 [shape = 'u32[144,128]{1,0:T(1,128)}', space=vmem, size = 0x12000, scoped, tag = 'internal scratch']
  %s0 = inlined_call_operand.hbm [shape: f32[1,16], index: 0, kind: input, shape index: {}]
  %s1 = inlined_call_operand.vmem [shape: f32[1,256], index: 1, kind: input, shape index: {}]
  %s2 = inlined_call_operand.hbm [shape: f32[1,1024], index: 2, kind: input, shape index: {}]
  %s3 = inlined_call_operand.vmem [shape: f32[1,1024], index: 3, kind: input, shape index: {}]
  %s4 = inlined_call_operand.hbm [shape: f32[1,16], index: 4, kind: output, shape index: {0}]
  %s5 = inlined_call_operand.hbm [shape: f32[1,256], index: 5, kind: output, shape index: {1}]
  %s6 = inlined_call_operand.hbm [shape: f32[1,1024], index: 6, kind: output, shape index: {2}]
  %s7 = inlined_call_operand.hbm [shape: f32[1,1024], index: 7, kind: output, shape index: {3}]
  %8 = xla_tuple %s4, %s5, %s6, %s7
  %s9 = sld [smem:[#allocation0]]
  $region58: #{tpu_custom_call.1} parent=0
    _
  %s11 = ssub.s32 1, %s9
  %s12 = scalar_select 0, %s11, %s9
  $region1: #{tpu_custom_call.1} parent=0
    #allocation2 [shape = 'u8[512]{0}', space=vmem, size = 0x400, scoped, tag = 'input window, operand 0, single buffered']
    #allocation3 [shape = 's32[1]{0}', space=sflag, size = 0x4, scoped, tag = 'scoped memory for tpu_custom_call.1']
    #allocation4 [shape = 's32[1]{0}', space=sflag, size = 0x4, scoped, tag = 'scoped memory for tpu_custom_call.1']
    #allocation5 [shape = 'u8[4096]{0}', space=vmem, size = 0x1000, scoped, tag = 'input window, operand 2, single buffered']
    #allocation6 [shape = 's32[1]{0}', space=sflag, size = 0x4, scoped, tag = 'scoped memory for tpu_custom_call.1']
    #allocation7 [shape = 'u8[512]{0}', space=vmem, size = 0x400, scoped, tag = 'output window, operand 0, single buffered']
    #allocation8 [shape = 'u8[1024]{0}', space=vmem, size = 0x400, scoped, tag = 'output window, operand 1, single buffered']
    #allocation9 [shape = 's32[1]{0}', space=sflag, size = 0x4, scoped, tag = 'scoped memory for tpu_custom_call.1']
    #allocation10 [shape = 'u8[4096]{0}', space=vmem, size = 0x1000, scoped, tag = 'output window, operand 2, single buffered']
    #allocation11 [shape = 'u8[4096]{0}', space=vmem, size = 0x1000, scoped, tag = 'output window, operand 3, single buffered']
    #allocation12 [shape = 's32[1]{0}', space=sflag, size = 0x4, scoped, tag = 'scoped memory for tpu_custom_call.1']
    %13 = vsyncpa [#allocation3], 0
    %14 = vsyncpa [#allocation6], 0
    %15 = vsyncpa [#allocation4], 0
    %16 = vsyncpa [#allocation9], 0
    %17 = vsyncpa [#allocation12], 0
    // Predicated region
    $region2: #{tpu_custom_call.1} parent=1 // pred_check
      _
    $region3: #{tpu_custom_call.1} parent=1 // pred_check_branch
      %19 = sbr.rel (0) target = $region5
    $region4: #{tpu_custom_call.1} parent=1 // pred_region
      %s21 = ssub.s32 16, 16
      %22 = vsyncadd [#allocation3], %s21
      %s24 = sshll.u32 [#allocation2], 4
      %s25 = int_to_ptr.vmem [resolvable:$true] %s24
      %27 = dma.hbm_to_vmem [thread:$0]  %s0, 16, %s25, [#allocation3]
    $region5: #{tpu_custom_call.1} parent=1 // pred_fallthru
      _
    // Predicated region
    $region6: #{tpu_custom_call.1} parent=1 // pred_check
      _
    $region7: #{tpu_custom_call.1} parent=1 // pred_check_branch
      %29 = sbr.rel (0) target = $region9
    $region8: #{tpu_custom_call.1} parent=1 // pred_region
      _
    $region9: #{tpu_custom_call.1} parent=1 // pred_fallthru
      _
    // Predicated region
    $region10: #{tpu_custom_call.1} parent=1 // pred_check
      _
    $region11: #{tpu_custom_call.1} parent=1 // pred_check_branch
      %31 = sbr.rel (0) target = $region13
    $region12: #{tpu_custom_call.1} parent=1 // pred_region
      %s33 = ssub.s32 128, 128
      %34 = vsyncadd [#allocation6], %s33
      %s36 = sshll.u32 [#allocation5], 4
      %s37 = int_to_ptr.vmem [resolvable:$true] %s36
      %39 = dma.hbm_to_vmem [thread:$0]  %s2, 128, %s37, [#allocation6]
    $region13: #{tpu_custom_call.1} parent=1 // pred_fallthru
      _
    // Predicated region
    $region14: #{tpu_custom_call.1} parent=1 // pred_check
      _
    $region15: #{tpu_custom_call.1} parent=1 // pred_check_branch
      %41 = sbr.rel (0) target = $region17
    $region16: #{tpu_custom_call.1} parent=1 // pred_region
      _
    $region17: #{tpu_custom_call.1} parent=1 // pred_fallthru
      _
    // Predicated region
    $region18: #{tpu_custom_call.1} parent=1 // pred_check
      _
    $region19: #{tpu_custom_call.1} parent=1 // pred_check_branch
      %43 = sbr.rel (0) target = $region21
    $region20: #{tpu_custom_call.1} parent=1 // pred_region
      %44 = dma.done [#allocation3], 16
    $region21: #{tpu_custom_call.1} parent=1 // pred_fallthru
      _
    // Predicated region
    $region22: #{tpu_custom_call.1} parent=1 // pred_check
      _
    $region23: #{tpu_custom_call.1} parent=1 // pred_check_branch
      %46 = sbr.rel (0) target = $region25
    $region24: #{tpu_custom_call.1} parent=1 // pred_region
      %47 = dma.done [#allocation6], 128
    $region25: #{tpu_custom_call.1} parent=1 // pred_fallthru
      _
    %v48 = vld [vmem:[#allocation2] sm:$0x1]
    %v49 = vmul.f32 %v48, 2.0
    %v50 = vsub.f32 %v49, 1.0
    %v51 = vadd.f32 %v50, 3.0
    %v52 = vmax.f32 %v51, 0.0
    %v53 = vmin.f32 %v52, 6.0
    %v54 = vmul.f32 %v53, 0.16666667
    %vm55 = vcmask 122880
    %56 = vst.msk [vmem:[#allocation7] sm:$0x1] %vm55, %v54
    %v57 = vld [vmem:[%s1] sm:$0x3]
    %v58 = vmul.f32 %v57, 2.0
    %v59 = vsub.f32 %v58, 1.0
    %v60 = vadd.f32 %v59, 3.0
    %v61 = vmax.f32 %v60, 0.0
    %v62 = vmin.f32 %v61, 6.0
    %v63 = vmul.f32 %v62, 0.16666667
    %v64 = vlaneseq
    %vm65 = vcmp.ge.s32.totalorder %v64, 0
    %vm66 = vcmp.lt.s32.totalorder %v64, 256
    %vm67 = vmand %vm65, %vm66
    %68 = vst.msk [vmem:[#allocation8] sm:$0x3] %vm67, %v63
    %v69 = vld [vmem:[#allocation5] sm:$0xff]
    %v70 = vmul.f32 %v69, 2.0
    %v71 = vsub.f32 %v70, 1.0
    %v72 = vadd.f32 %v71, 3.0
    %v73 = vmax.f32 %v72, 0.0
    %v74 = vmin.f32 %v73, 6.0
    %v75 = vmul.f32 %v74, 0.16666667
    %76 = vst [vmem:[#allocation10] sm:$0xff] %v75
    %v77 = vld [vmem:[%s3] sm:$0xff]
    %v78 = vmul.f32 %v77, 2.0
    %v79 = vsub.f32 %v78, 1.0
    %v80 = vadd.f32 %v79, 3.0
    %v81 = vmax.f32 %v80, 0.0
    %v82 = vmin.f32 %v81, 6.0
    %v83 = vmul.f32 %v82, 0.16666667
    %84 = vst [vmem:[#allocation11] sm:$0xff] %v83
    // Predicated region
    $region26: #{tpu_custom_call.1} parent=1 // pred_check
      _
    $region27: #{tpu_custom_call.1} parent=1 // pred_check_branch
      %86 = sbr.rel (0) target = $region29
    $region28: #{tpu_custom_call.1} parent=1 // pred_region
      %s88 = ssub.s32 16, 16
      %89 = vsyncadd [#allocation4], %s88
      %s91 = sshll.u32 [#allocation7], 4
      %s92 = int_to_ptr.vmem [resolvable:$true] %s91
      %94 = dma.vmem_to_hbm [thread:$0]  %s92, 16, %s4, [#allocation4]
    $region29: #{tpu_custom_call.1} parent=1 // pred_fallthru
      _
    // Predicated region
    $region30: #{tpu_custom_call.1} parent=1 // pred_check
      _
    $region31: #{tpu_custom_call.1} parent=1 // pred_check_branch
      %96 = sbr.rel (0) target = $region33
    $region32: #{tpu_custom_call.1} parent=1 // pred_region
      %s98 = ssub.s32 32, 32
      %99 = vsyncadd [#allocation9], %s98
      %s101 = sshll.u32 [#allocation8], 4
      %s102 = int_to_ptr.vmem [resolvable:$true] %s101
      %104 = dma.vmem_to_hbm [thread:$0]  %s102, 32, %s5, [#allocation9]
    $region33: #{tpu_custom_call.1} parent=1 // pred_fallthru
      _
    // Predicated region
    $region34: #{tpu_custom_call.1} parent=1 // pred_check
      _
    $region35: #{tpu_custom_call.1} parent=1 // pred_check_branch
      %106 = sbr.rel (0) target = $region37
    $region36: #{tpu_custom_call.1} parent=1 // pred_region
      %s108 = ssub.s32 128, 128
      %109 = vsyncadd [#allocation9], %s108
      %s111 = sshll.u32 [#allocation10], 4
      %s112 = int_to_ptr.vmem [resolvable:$true] %s111
      %114 = dma.vmem_to_hbm [thread:$0]  %s112, 128, %s6, [#allocation9]
    $region37: #{tpu_custom_call.1} parent=1 // pred_fallthru
      _
    // Predicated region
    $region38: #{tpu_custom_call.1} parent=1 // pred_check
      _
    $region39: #{tpu_custom_call.1} parent=1 // pred_check_branch
      %116 = sbr.rel (0) target = $region41
    $region40: #{tpu_custom_call.1} parent=1 // pred_region
      %s118 = ssub.s32 128, 128
      %119 = vsyncadd [#allocation12], %s118
      %s121 = sshll.u32 [#allocation11], 4
      %s122 = int_to_ptr.vmem [resolvable:$true] %s121
      %124 = dma.vmem_to_hbm [thread:$0]  %s122, 128, %s7, [#allocation12]
    $region41: #{tpu_custom_call.1} parent=1 // pred_fallthru
      _
    // Predicated region
    $region42: #{tpu_custom_call.1} parent=1 // pred_check
      _
    $region43: #{tpu_custom_call.1} parent=1 // pred_check_branch
      %126 = sbr.rel (0) target = $region45
    $region44: #{tpu_custom_call.1} parent=1 // pred_region
      %127 = dma.done [#allocation4], 16
    $region45: #{tpu_custom_call.1} parent=1 // pred_fallthru
      _
    // Predicated region
    $region46: #{tpu_custom_call.1} parent=1 // pred_check
      _
    $region47: #{tpu_custom_call.1} parent=1 // pred_check_branch
      %129 = sbr.rel (0) target = $region49
    $region48: #{tpu_custom_call.1} parent=1 // pred_region
      %130 = dma.done [#allocation9], 32
    $region49: #{tpu_custom_call.1} parent=1 // pred_fallthru
      _
    // Predicated region
    $region50: #{tpu_custom_call.1} parent=1 // pred_check
      _
    $region51: #{tpu_custom_call.1} parent=1 // pred_check_branch
      %132 = sbr.rel (0) target = $region53
    $region52: #{tpu_custom_call.1} parent=1 // pred_region
      %133 = dma.done [#allocation9], 128
    $region53: #{tpu_custom_call.1} parent=1 // pred_fallthru
      _
    // Predicated region
    $region54: #{tpu_custom_call.1} parent=1 // pred_check
      _
    $region55: #{tpu_custom_call.1} parent=1 // pred_check_branch
      %135 = sbr.rel (0) target = $region57
    $region56: #{tpu_custom_call.1} parent=1 // pred_region
      %136 = dma.done [#allocation12], 128
    $region57: #{tpu_custom_call.1} parent=1 // pred_fallthru
      _
    %137 = vsyncpa [#allocation3], 1
    %138 = vsyncpa [#allocation6], 1
    %139 = vsyncpa [#allocation4], 1
    %140 = vsyncpa [#allocation9], 1
    %141 = vsyncpa [#allocation12], 1

</llo_original>
